<compile_context>
chip_gen: v7x
topology: tpu7x:2x2x1
jax: 0.10.0
libtpu: 0.0.40
codegen_flags: <defaults>
</compile_context>

<pallas_src>
import math
import functools

import jax
import jax.numpy as jnp
from jax import lax
from jax.experimental import pallas as pl
from jax.experimental.pallas import tpu as pltpu

HIDDEN = 128
LANE = 128        # padded output width (lane-dense Q store)
MAX_TILE_B = 512  # per review: 256-512 row tiles amortize the ~0.35us/step pipeline overhead


def _dqn_kernel(x_ref, w1_ref, b1_ref, w2_ref, b2_ref, w3_ref, b3_ref,
                *out_refs, n_action, want_q):
    if want_q:
        q_ref, act_ref = out_refs
    else:
        (act_ref,) = out_refs

    # ---- Layer 1: Linear(obs_dim -> 128) + ReLU as VPU broadcast-FMAs (K is tiny, f32). ----
    x = x_ref[...]        # (tile_b, obs_dim) f32
    w1 = w1_ref[...]      # (obs_dim, 128)    f32
    acc = x[:, 0:1] * w1[0:1, :] + b1_ref[...]
    for k in range(1, x.shape[1]):   # static tiny unroll over obs_dim
        acc = acc + x[:, k:k + 1] * w1[k:k + 1, :]
    h1 = jnp.maximum(acc, 0.0)

    # ---- Layer 2: Linear(128 -> 128) + ReLU (bf16 MXU, f32 accumulate, f32 bias/ReLU). ----
    h2 = jnp.dot(h1.astype(w2_ref.dtype), w2_ref[...],
                 preferred_element_type=jnp.float32)
    h2 = jnp.maximum(h2 + b2_ref[...], 0.0)

    # ---- Layer 3: Linear(128 -> n_action), output lanes padded to 128 (padded cols zero). ----
    q = jnp.dot(h2.astype(w3_ref.dtype), w3_ref[...],
                preferred_element_type=jnp.float32)
    q = q + b3_ref[...]

    if want_q:
        q_ref[...] = q.astype(q_ref.dtype)

    # ---- Fused greedy action: argmax over real action lanes (padded lanes -> -inf). ----
    lane = lax.broadcasted_iota(jnp.int32, q.shape, 1)
    q_masked = jnp.where(lane < n_action, q, -jnp.inf)
    q_max = jnp.max(q_masked, axis=1, keepdims=True)
    # first index attaining the max (matches torch.argmax tie-breaking)
    act = jnp.min(jnp.where(q_masked == q_max, lane, jnp.int32(n_action)),
                  axis=1, keepdims=True)
    # NaN guard: an all-NaN row would otherwise produce the out-of-range index n_action.
    act = jnp.minimum(act, n_action - 1)
    # (tile_b,1) int32 masked store: negligible bytes, accepted per review.
    act_ref[...] = act.astype(jnp.int32)


def prepare_params(params, n_action):
    """One-time (parameter-update-time) weight prep: zero-pad the final layer to 128 lanes
    and cast the MXU-path weights to bf16. Keep layer-1 weights in f32 (VPU path)."""
    w1, b1, w2, b2, w3, b3 = params
    w3p = jnp.zeros((HIDDEN, LANE), jnp.float32).at[:, :n_action].set(w3)
    b3p = jnp.zeros((1, LANE), jnp.float32).at[:, :n_action].set(b3)
    return dict(
        w1=w1.astype(jnp.float32), b1=b1.astype(jnp.float32),
        w2=w2.astype(jnp.bfloat16), b2=b2.astype(jnp.float32),
        w3=w3p.astype(jnp.bfloat16), b3=b3p,
        n_action=int(n_action),
    )


def _choose_tile_b(B):
    Bp8 = max(8, ((B + 7) // 8) * 8)
    if Bp8 <= 256:
        # Inference-sized batch: single grid step (per-step overhead dominates the work).
        return Bp8
    # Training-sized batch: tiles up to MAX_TILE_B rows, even number of grid steps so the
    # "parallel" batch axis lands on both v7x TensorCores.
    n_tiles = 2 * ((Bp8 + 2 * MAX_TILE_B - 1) // (2 * MAX_TILE_B))
    tile = ((Bp8 + n_tiles - 1) // n_tiles + 7) // 8 * 8
    return tile


def dqn_forward(x, prepared, *, want_q=True, q_dtype=jnp.float32, tile_b=None):
    """Fused 3-layer MLP forward + greedy action.

    x: (B, obs_dim) f32.  prepared: output of prepare_params().
    Returns (q_pad, action):
      q_pad: (Bp, 128) q_dtype padded Q slab (None if want_q=False). Consumers should slice
             lazily / gather Q[a] downstream rather than materializing q_pad[:B, :n_action].
      action: (B,) int32 greedy action.
    """
    n_action = prepared["n_action"]
    B, obs_dim = x.shape

    if tile_b is None:
        tile_b = _choose_tile_b(B)
    n_tiles = pl.cdiv(B, tile_b)
    Bp = n_tiles * tile_b

    xb = x.astype(jnp.float32)
    if Bp != B:
        xb = jnp.pad(xb, ((0, Bp - B), (0, 0)))

    kernel = functools.partial(_dqn_kernel, n_action=n_action, want_q=want_q)

    # Weights/biases: constant index_map -> VMEM-resident across grid steps.
    # (pipeline_mode=pl.Buffered(1) would drop the redundant 2nd buffer; cosmetic, skipped.)
    const2d = lambda shape: pl.BlockSpec(shape, lambda i: (0, 0))

    act_shape = jax.ShapeDtypeStruct((Bp, 1), jnp.int32)
    act_spec = pl.BlockSpec((tile_b, 1), lambda i: (i, 0))
    if want_q:
        out_shape = (jax.ShapeDtypeStruct((Bp, LANE), q_dtype), act_shape)
        out_specs = (pl.BlockSpec((tile_b, LANE), lambda i: (i, 0)), act_spec)
    else:
        out_shape = act_shape
        out_specs = act_spec

    outs = pl.pallas_call(
        kernel,
        out_shape=out_shape,
        grid=(n_tiles,),
        in_specs=[
            pl.BlockSpec((tile_b, obs_dim), lambda i: (i, 0)),
            const2d(prepared["w1"].shape), const2d(prepared["b1"].shape),
            const2d(prepared["w2"].shape), const2d(prepared["b2"].shape),
            const2d(prepared["w3"].shape), const2d(prepared["b3"].shape),
        ],
        out_specs=out_specs,
        compiler_params=pltpu.CompilerParams(
            dimension_semantics=("parallel",),  # v7x megacore; harmless on v5e/v6e
        ),
    )(xb, prepared["w1"], prepared["b1"], prepared["w2"], prepared["b2"],
      prepared["w3"], prepared["b3"])

    if want_q:
        q_pad, act_pad = outs
    else:
        q_pad, act_pad = None, outs
    return q_pad, act_pad[:B, 0]


def init_linear(key, in_features, out_features):
    """Deterministic init mimicking PyTorch nn.Linear default (uniform +/- 1/sqrt(fan_in)).
    Weight returned as (in_features, out_features); bias as (1, out_features)."""
    kw, kb = jax.random.split(key)
    bound = 1.0 / math.sqrt(in_features)
    w = jax.random.uniform(kw, (in_features, out_features), jnp.float32, -bound, bound)
    b = jax.random.uniform(kb, (1, out_features), jnp.float32, -bound, bound)
    return w, b


def reference_forward(x, params):
    w1, b1, w2, b2, w3, b3 = params
    h1 = jnp.maximum(x @ w1 + b1, 0.0)
    h2 = jnp.maximum(h1 @ w2 + b2, 0.0)
    return h2 @ w3 + b3


if __name__ == "__main__":
    # Small DQN config: CartPole-like obs_shape=(4,), n_action=2, hidden=128.
    obs_dim = 4
    n_action = 2
    batch = 8

    key = jax.random.PRNGKey(0)
    k_x, k1, k2, k3 = jax.random.split(key, 4)

    x = jax.random.normal(k_x, (batch, obs_dim), jnp.float32)
    w1, b1 = init_linear(k1, obs_dim, HIDDEN)
    w2, b2 = init_linear(k2, HIDDEN, HIDDEN)
    w3, b3 = init_linear(k3, HIDDEN, n_action)
    params = (w1, b1, w2, b2, w3, b3)

    # One-time weight prep (parameter-update time, NOT per forward call).
    prepared = prepare_params(params, n_action)

    # Training-style call: Q values + greedy action.
    q_pad, act = dqn_forward(x, prepared, want_q=True)
    q_pad, act = jax.block_until_ready((q_pad, act))
    # Validation-only slice; hot-path consumers keep the padded slab / fuse the gather.
    q = q_pad[:batch, :n_action]

    q_ref = reference_forward(x, params)
    assert q.shape == (batch, n_action)
    assert act.shape == (batch,)
    # bf16 MXU path (layers 2/3) -> loosened tolerance vs f32 reference
    assert jnp.allclose(q, q_ref, atol=2e-2, rtol=2e-2), "mismatch vs JAX reference"
    # fused argmax must agree with argmax over the kernel's own Q output
    assert jnp.array_equal(act, jnp.argmax(q, axis=1).astype(jnp.int32)), "argmax mismatch"

    # Acting-path call: greedy action only, no Q writeback at all.
    q_none, act_only = dqn_forward(x, prepared, want_q=False)
    act_only = jax.block_until_ready(act_only)
    assert q_none is None
    assert jnp.array_equal(act_only, act), "act-only path mismatch"

    # TODO(synk): epsilon schedule / random exploration, cal_loss TD target & MSE, and the
    # TensorBoard writer are host/training-side logic, not part of the forward kernel.

    print("KERNEL_OK")
</pallas_src>

<mosaic_0001>
module attributes {stable_mosaic.version = 11 : i64} {
  func.func @_dqn_kernel(%arg0: i32, %arg1: memref<8x4xf32, #tpu.memory_space<vmem>>, %arg2: memref<4x128xf32, #tpu.memory_space<vmem>>, %arg3: memref<1x128xf32, #tpu.memory_space<vmem>>, %arg4: memref<128x128xbf16, #tpu.memory_space<vmem>>, %arg5: memref<1x128xf32, #tpu.memory_space<vmem>>, %arg6: memref<128x128xbf16, #tpu.memory_space<vmem>>, %arg7: memref<1x128xf32, #tpu.memory_space<vmem>>, %arg8: memref<8x128xf32, #tpu.memory_space<vmem>>, %arg9: memref<8x1xi32, #tpu.memory_space<vmem>>) attributes {dimension_semantics = [#tpu.dimension_semantics<parallel>], iteration_bounds = array<i64: 1>, scalar_prefetch = 0 : i64, scratch_operands = 0 : i64, tpu.core_type = #tpu.core_type<tc>, window_params = [{transform_indices = @transform_0, window_bounds = array<i64: 8, 4>}, {pipeline_mode = #tpu.pipeline_mode<synchronous>, transform_indices = @transform_1, window_bounds = array<i64: 4, 128>}, {pipeline_mode = #tpu.pipeline_mode<synchronous>, transform_indices = @transform_2, window_bounds = array<i64: 1, 128>}, {pipeline_mode = #tpu.pipeline_mode<synchronous>, transform_indices = @transform_3, window_bounds = array<i64: 128, 128>}, {pipeline_mode = #tpu.pipeline_mode<synchronous>, transform_indices = @transform_4, window_bounds = array<i64: 1, 128>}, {pipeline_mode = #tpu.pipeline_mode<synchronous>, transform_indices = @transform_5, window_bounds = array<i64: 128, 128>}, {pipeline_mode = #tpu.pipeline_mode<synchronous>, transform_indices = @transform_6, window_bounds = array<i64: 1, 128>}, {transform_indices = @transform_7, window_bounds = array<i64: 8, 128>}, {transform_indices = @transform_8, window_bounds = array<i64: 8, 1>}]} {
    %c0 = arith.constant 0 : index
    %c0_0 = arith.constant 0 : index
    %0 = vector.load %arg1[%c0, %c0_0] : memref<8x4xf32, #tpu.memory_space<vmem>>, vector<8x4xf32>
    %c0_1 = arith.constant 0 : index
    %c0_2 = arith.constant 0 : index
    %1 = vector.load %arg2[%c0_1, %c0_2] : memref<4x128xf32, #tpu.memory_space<vmem>>, vector<4x128xf32>
    %2 = vector.extract_strided_slice %0 {offsets = [0, 0], sizes = [8, 1], strides = [1, 1]} : vector<8x4xf32> to vector<8x1xf32>
    %3 = vector.extract_strided_slice %1 {offsets = [0, 0], sizes = [1, 128], strides = [1, 1]} : vector<4x128xf32> to vector<1x128xf32>
    %4 = vector.broadcast %2 : vector<8x1xf32> to vector<8x128xf32>
    %5 = vector.broadcast %3 : vector<1x128xf32> to vector<8x128xf32>
    %6 = arith.mulf %4, %5 : vector<8x128xf32>
    %c0_3 = arith.constant 0 : index
    %c0_4 = arith.constant 0 : index
    %7 = vector.load %arg3[%c0_3, %c0_4] : memref<1x128xf32, #tpu.memory_space<vmem>>, vector<1x128xf32>
    %8 = vector.broadcast %7 : vector<1x128xf32> to vector<8x128xf32>
    %9 = arith.addf %6, %8 : vector<8x128xf32>
    %10 = vector.extract_strided_slice %0 {offsets = [0, 1], sizes = [8, 1], strides = [1, 1]} : vector<8x4xf32> to vector<8x1xf32>
    %11 = vector.extract_strided_slice %1 {offsets = [1, 0], sizes = [1, 128], strides = [1, 1]} : vector<4x128xf32> to vector<1x128xf32>
    %12 = vector.broadcast %10 : vector<8x1xf32> to vector<8x128xf32>
    %13 = vector.broadcast %11 : vector<1x128xf32> to vector<8x128xf32>
    %14 = arith.mulf %12, %13 : vector<8x128xf32>
    %15 = arith.addf %9, %14 : vector<8x128xf32>
    %16 = vector.extract_strided_slice %0 {offsets = [0, 2], sizes = [8, 1], strides = [1, 1]} : vector<8x4xf32> to vector<8x1xf32>
    %17 = vector.extract_strided_slice %1 {offsets = [2, 0], sizes = [1, 128], strides = [1, 1]} : vector<4x128xf32> to vector<1x128xf32>
    %18 = vector.broadcast %16 : vector<8x1xf32> to vector<8x128xf32>
    %19 = vector.broadcast %17 : vector<1x128xf32> to vector<8x128xf32>
    %20 = arith.mulf %18, %19 : vector<8x128xf32>
    %21 = arith.addf %15, %20 : vector<8x128xf32>
    %22 = vector.extract_strided_slice %0 {offsets = [0, 3], sizes = [8, 1], strides = [1, 1]} : vector<8x4xf32> to vector<8x1xf32>
    %23 = vector.extract_strided_slice %1 {offsets = [3, 0], sizes = [1, 128], strides = [1, 1]} : vector<4x128xf32> to vector<1x128xf32>
    %24 = vector.broadcast %22 : vector<8x1xf32> to vector<8x128xf32>
    %25 = vector.broadcast %23 : vector<1x128xf32> to vector<8x128xf32>
    %26 = arith.mulf %24, %25 : vector<8x128xf32>
    %27 = arith.addf %21, %26 : vector<8x128xf32>
    %cst = arith.constant 0.000000e+00 : f32
    %28 = vector.broadcast %cst : f32 to vector<8x128xf32>
    %29 = arith.maximumf %27, %28 : vector<8x128xf32>
    %30 = arith.truncf %29 : vector<8x128xf32> to vector<8x128xbf16>
    %c0_5 = arith.constant 0 : index
    %c0_6 = arith.constant 0 : index
    %31 = vector.load %arg4[%c0_5, %c0_6] : memref<128x128xbf16, #tpu.memory_space<vmem>>, vector<128x128xbf16>
    %cst_7 = arith.constant dense<0.000000e+00> : vector<8x128xf32>
    %32 = tpu.matmul %30, %31, %cst_7 {dimension_numbers = #tpu.dot_dimension_numbers<[1], [0], [0], [1], [0, 0, 1, 1], [], []>} : vector<8x128xbf16>, vector<128x128xbf16>, vector<8x128xf32> -> vector<8x128xf32>
    %c0_8 = arith.constant 0 : index
    %c0_9 = arith.constant 0 : index
    %33 = vector.load %arg5[%c0_8, %c0_9] : memref<1x128xf32, #tpu.memory_space<vmem>>, vector<1x128xf32>
    %34 = vector.broadcast %33 : vector<1x128xf32> to vector<8x128xf32>
    %35 = arith.addf %32, %34 : vector<8x128xf32>
    %cst_10 = arith.constant 0.000000e+00 : f32
    %36 = vector.broadcast %cst_10 : f32 to vector<8x128xf32>
    %37 = arith.maximumf %35, %36 : vector<8x128xf32>
    %38 = arith.truncf %37 : vector<8x128xf32> to vector<8x128xbf16>
    %c0_11 = arith.constant 0 : index
    %c0_12 = arith.constant 0 : index
    %39 = vector.load %arg6[%c0_11, %c0_12] : memref<128x128xbf16, #tpu.memory_space<vmem>>, vector<128x128xbf16>
    %cst_13 = arith.constant dense<0.000000e+00> : vector<8x128xf32>
    %40 = tpu.matmul %38, %39, %cst_13 {dimension_numbers = #tpu.dot_dimension_numbers<[1], [0], [0], [1], [0, 0, 1, 1], [], []>} : vector<8x128xbf16>, vector<128x128xbf16>, vector<8x128xf32> -> vector<8x128xf32>
    %c0_14 = arith.constant 0 : index
    %c0_15 = arith.constant 0 : index
    %41 = vector.load %arg7[%c0_14, %c0_15] : memref<1x128xf32, #tpu.memory_space<vmem>>, vector<1x128xf32>
    %42 = vector.broadcast %41 : vector<1x128xf32> to vector<8x128xf32>
    %43 = arith.addf %40, %42 : vector<8x128xf32>
    %c0_16 = arith.constant 0 : index
    %c0_17 = arith.constant 0 : index
    %44 = vector.load %arg8[%c0_16, %c0_17] : memref<8x128xf32, #tpu.memory_space<vmem>>, vector<8x128xf32>
    tpu.vector_store %arg8[%c0_16, %c0_17], %43 {strides = array<i32>} : memref<8x128xf32, #tpu.memory_space<vmem>>, vector<8x128xf32>,
    %45 = tpu.iota {dimensions = array<i32: 1>} : vector<8x128xi32>
    %c2_i32 = arith.constant 2 : i32
    %46 = vector.broadcast %c2_i32 : i32 to vector<8x128xi32>
    %47 = arith.cmpi slt, %45, %46 : vector<8x128xi32>
    %cst_18 = arith.constant 0xFF800000 : f32
    %48 = vector.broadcast %cst_18 : f32 to vector<8x128xf32>
    %49 = arith.select %47, %43, %48 : vector<8x128xi1>, vector<8x128xf32>
    %cst_19 = arith.constant dense<0xFF800000> : vector<8xf32>
    %50 = vector.multi_reduction <maximumf>, %49, %cst_19 [1] : vector<8x128xf32> to vector<8xf32>
    %51 = vector.shape_cast %50 : vector<8xf32> to vector<8x1xf32>
    %52 = vector.broadcast %51 : vector<8x1xf32> to vector<8x128xf32>
    %53 = arith.cmpf oeq, %49, %52 : vector<8x128xf32>
    %c2_i32_20 = arith.constant 2 : i32
    %54 = vector.broadcast %c2_i32_20 : i32 to vector<8x128xi32>
    %55 = arith.select %53, %45, %54 : vector<8x128xi1>, vector<8x128xi32>
    %cst_21 = arith.constant dense<2147483647> : vector<8xi32>
    %56 = vector.multi_reduction <minsi>, %55, %cst_21 [1] : vector<8x128xi32> to vector<8xi32>
    %57 = vector.shape_cast %56 : vector<8xi32> to vector<8x1xi32>
    %c1_i32 = arith.constant 1 : i32
    %58 = vector.broadcast %c1_i32 : i32 to vector<8x1xi32>
    %59 = arith.minsi %57, %58 : vector<8x1xi32>
    %c0_22 = arith.constant 0 : index
    %c0_23 = arith.constant 0 : index
    %60 = vector.load %arg9[%c0_22, %c0_23] : memref<8x1xi32, #tpu.memory_space<vmem>>, vector<8x1xi32>
    tpu.vector_store %arg9[%c0_22, %c0_23], %59 {strides = array<i32>} : memref<8x1xi32, #tpu.memory_space<vmem>>, vector<8x1xi32>,
    return
  }
  func.func @transform_0(%arg0: i32) -> (i32, i32) {
    %c0_i32 = arith.constant 0 : i32
    %c0_i32_0 = arith.constant 0 : i32
    return %arg0, %c0_i32 : i32, i32
  }
  func.func @transform_1(%arg0: i32) -> (i32, i32) {
    %c0_i32 = arith.constant 0 : i32
    %c0_i32_0 = arith.constant 0 : i32
    %c0_i32_1 = arith.constant 0 : i32
    return %c0_i32, %c0_i32_0 : i32, i32
  }
  func.func @transform_2(%arg0: i32) -> (i32, i32) {
    %c0_i32 = arith.constant 0 : i32
    %c0_i32_0 = arith.constant 0 : i32
    %c0_i32_1 = arith.constant 0 : i32
    return %c0_i32, %c0_i32_0 : i32, i32
  }
  func.func @transform_3(%arg0: i32) -> (i32, i32) {
    %c0_i32 = arith.constant 0 : i32
    %c0_i32_0 = arith.constant 0 : i32
    %c0_i32_1 = arith.constant 0 : i32
    return %c0_i32, %c0_i32_0 : i32, i32
  }
  func.func @transform_4(%arg0: i32) -> (i32, i32) {
    %c0_i32 = arith.constant 0 : i32
    %c0_i32_0 = arith.constant 0 : i32
    %c0_i32_1 = arith.constant 0 : i32
    return %c0_i32, %c0_i32_0 : i32, i32
  }
  func.func @transform_5(%arg0: i32) -> (i32, i32) {
    %c0_i32 = arith.constant 0 : i32
    %c0_i32_0 = arith.constant 0 : i32
    %c0_i32_1 = arith.constant 0 : i32
    return %c0_i32, %c0_i32_0 : i32, i32
  }
  func.func @transform_6(%arg0: i32) -> (i32, i32) {
    %c0_i32 = arith.constant 0 : i32
    %c0_i32_0 = arith.constant 0 : i32
    %c0_i32_1 = arith.constant 0 : i32
    return %c0_i32, %c0_i32_0 : i32, i32
  }
  func.func @transform_7(%arg0: i32) -> (i32, i32) {
    %c0_i32 = arith.constant 0 : i32
    %c0_i32_0 = arith.constant 0 : i32
    return %arg0, %c0_i32 : i32, i32
  }
  func.func @transform_8(%arg0: i32) -> (i32, i32) {
    %c0_i32 = arith.constant 0 : i32
    %c0_i32_0 = arith.constant 0 : i32
    return %arg0, %c0_i32 : i32, i32
  }
}

</mosaic_0001>

<llo_original>
// kernel: tpu_custom_call.1
$region0: #{tpu_custom_call.1}
  #allocation0 [shape = 'u32[]', space=smem, size = 0x4, offset = 0x4, fixed_abs, tag = 'smem constant byte address 0x4 - core index']
  #allocation1 [shape = 'u32[144,128]{1,0:T(1,128)}', space=vmem, size = 0x12000, scoped, tag = 'internal scratch']
  %s0 = inlined_call_operand.vmem [shape: f32[8,4], index: 0, kind: input, shape index: {}]
  %s1 = inlined_call_operand.vmem [shape: f32[4,128], index: 1, kind: input, shape index: {}]
  %s2 = inlined_call_operand.vmem [shape: f32[1,128], index: 2, kind: input, shape index: {}]
  %s3 = inlined_call_operand.hbm [shape: bf16[128,128], index: 3, kind: input, shape index: {}]
  %s4 = inlined_call_operand.vmem [shape: f32[1,128], index: 4, kind: input, shape index: {}]
  %s5 = inlined_call_operand.hbm [shape: bf16[128,128], index: 5, kind: input, shape index: {}]
  %s6 = inlined_call_operand.vmem [shape: f32[1,128], index: 6, kind: input, shape index: {}]
  %s7 = inlined_call_operand.hbm [shape: f32[8,128], index: 7, kind: output, shape index: {0}]
  %s8 = inlined_call_operand.vmem [shape: s32[8,1], index: 8, kind: output, shape index: {1}]
  %9 = xla_tuple %s7, %s8
  %s10 = sld [smem:[#allocation0]]
  $region54: #{tpu_custom_call.1} parent=0
    _
  %s12 = ssub.s32 1, %s10
  %s13 = scalar_select 0, %s12, %s10
  $region1: #{tpu_custom_call.1} parent=0
    #allocation2 [shape = 'u8[32768]{0}', space=vmem, size = 0x8000, scoped, tag = 'input window, operand 3, single buffered']
    #allocation3 [shape = 's32[1]{0}', space=sflag, size = 0x4, scoped, tag = 'scoped memory for tpu_custom_call.1']
    #allocation4 [shape = 's32[1]{0}', space=sflag, size = 0x4, scoped, tag = 'scoped memory for tpu_custom_call.1']
    #allocation5 [shape = 'u8[32768]{0}', space=vmem, size = 0x8000, scoped, tag = 'input window, operand 5, single buffered']
    #allocation6 [shape = 's32[1]{0}', space=sflag, size = 0x4, scoped, tag = 'scoped memory for tpu_custom_call.1']
    #allocation7 [shape = 'u8[4096]{0}', space=vmem, size = 0x1000, scoped, tag = 'output window, operand 0, single buffered']
    %14 = vsyncpa [#allocation3], 0
    %15 = vsyncpa [#allocation6], 0
    %16 = vsyncpa [#allocation4], 0
    // Predicated region
    $region2: #{tpu_custom_call.1} parent=1 // pred_check
      _
    $region3: #{tpu_custom_call.1} parent=1 // pred_check_branch
      %18 = sbr.rel (0) target = $region5
    $region4: #{tpu_custom_call.1} parent=1 // pred_region
      _
    $region5: #{tpu_custom_call.1} parent=1 // pred_fallthru
      _
    // Predicated region
    $region6: #{tpu_custom_call.1} parent=1 // pred_check
      _
    $region7: #{tpu_custom_call.1} parent=1 // pred_check_branch
      %20 = sbr.rel (0) target = $region9
    $region8: #{tpu_custom_call.1} parent=1 // pred_region
      _
    $region9: #{tpu_custom_call.1} parent=1 // pred_fallthru
      _
    // Predicated region
    $region10: #{tpu_custom_call.1} parent=1 // pred_check
      _
    $region11: #{tpu_custom_call.1} parent=1 // pred_check_branch
      %22 = sbr.rel (0) target = $region13
    $region12: #{tpu_custom_call.1} parent=1 // pred_region
      _
    $region13: #{tpu_custom_call.1} parent=1 // pred_fallthru
      _
    // Predicated region
    $region14: #{tpu_custom_call.1} parent=1 // pred_check
      _
    $region15: #{tpu_custom_call.1} parent=1 // pred_check_branch
      %24 = sbr.rel (0) target = $region17
    $region16: #{tpu_custom_call.1} parent=1 // pred_region
      %s26 = ssub.s32 1024, 1024
      %27 = vsyncadd [#allocation3], %s26
      %s28 = sshll.u32 [#allocation2], 4
      %s29 = int_to_ptr.vmem [resolvable:$true] %s28
      %34 = dma.hbm_to_vmem [thread:$0]  %s3, 1024, %s29, [#allocation3], 64, 64, 4
    $region17: #{tpu_custom_call.1} parent=1 // pred_fallthru
      _
    // Predicated region
    $region18: #{tpu_custom_call.1} parent=1 // pred_check
      _
    $region19: #{tpu_custom_call.1} parent=1 // pred_check_branch
      %36 = sbr.rel (0) target = $region21
    $region20: #{tpu_custom_call.1} parent=1 // pred_region
      _
    $region21: #{tpu_custom_call.1} parent=1 // pred_fallthru
      _
    // Predicated region
    $region22: #{tpu_custom_call.1} parent=1 // pred_check
      _
    $region23: #{tpu_custom_call.1} parent=1 // pred_check_branch
      %38 = sbr.rel (0) target = $region25
    $region24: #{tpu_custom_call.1} parent=1 // pred_region
      %s40 = ssub.s32 1024, 1024
      %41 = vsyncadd [#allocation6], %s40
      %s42 = sshll.u32 [#allocation5], 4
      %s43 = int_to_ptr.vmem [resolvable:$true] %s42
      %48 = dma.hbm_to_vmem [thread:$0]  %s5, 1024, %s43, [#allocation6], 64, 64, 4
    $region25: #{tpu_custom_call.1} parent=1 // pred_fallthru
      _
    // Predicated region
    $region26: #{tpu_custom_call.1} parent=1 // pred_check
      _
    $region27: #{tpu_custom_call.1} parent=1 // pred_check_branch
      %50 = sbr.rel (0) target = $region29
    $region28: #{tpu_custom_call.1} parent=1 // pred_region
      _
    $region29: #{tpu_custom_call.1} parent=1 // pred_fallthru
      _
    // Predicated region
    $region30: #{tpu_custom_call.1} parent=1 // pred_check
      _
    $region31: #{tpu_custom_call.1} parent=1 // pred_check_branch
      %52 = sbr.rel (0) target = $region33
    $region32: #{tpu_custom_call.1} parent=1 // pred_region
      %53 = dma.done [#allocation3], 1024
    $region33: #{tpu_custom_call.1} parent=1 // pred_fallthru
      _
    // Predicated region
    $region34: #{tpu_custom_call.1} parent=1 // pred_check
      _
    $region35: #{tpu_custom_call.1} parent=1 // pred_check_branch
      %55 = sbr.rel (0) target = $region37
    $region36: #{tpu_custom_call.1} parent=1 // pred_region
      %56 = dma.done [#allocation6], 1024
    $region37: #{tpu_custom_call.1} parent=1 // pred_fallthru
      _
    %v58 = vld [vmem:[%s0] sm:$0xff]
    %v59 = vld [vmem:[%s1] sm:$0xf]
    %61 = vset.pattern.permute.xlu0 0
    %62 = vperm.xlu0 %61, %v58
    %v63 = vpop.permute.xlu0 %62
    %v65 = vlaneseq
    %v66 = vshrl.u32 %v65, 7
    %v67 = vsub.s32 0, %v66
    %v68 = vrot.slane %v59, %v67
    %v69 = vmul.f32 %v63, %v68
    %v70 = vld [vmem:[%s2] sm:$0x1]
    %v72 = vlaneseq
    %v73 = vshrl.u32 %v72, 7
    %v74 = vsub.s32 0, %v73
    %v75 = vrot.slane %v70, %v74
    %v77 = vadd.f32 %v69, %v75
    %78 = vset.pattern.permute.xlu0 1
    %79 = vperm.xlu0 %78, %v58
    %v80 = vpop.permute.xlu0 %79
    %v82 = vlaneseq
    %v83 = vshrl.u32 %v82, 7
    %v84 = vsub.s32 1, %v83
    %v85 = vrot.slane %v59, %v84
    %v86 = vmul.f32 %v80, %v85
    %v87 = vadd.f32 %v77, %v86
    %88 = vset.pattern.permute.xlu0 2
    %89 = vperm.xlu0 %88, %v58
    %v90 = vpop.permute.xlu0 %89
    %v92 = vlaneseq
    %v93 = vshrl.u32 %v92, 7
    %v94 = vsub.s32 2, %v93
    %v95 = vrot.slane %v59, %v94
    %v96 = vmul.f32 %v90, %v95
    %v97 = vadd.f32 %v87, %v96
    %98 = vset.pattern.permute.xlu0 3
    %99 = vperm.xlu0 %98, %v58
    %v100 = vpop.permute.xlu0 %99
    %v102 = vlaneseq
    %v103 = vshrl.u32 %v102, 7
    %v104 = vsub.s32 3, %v103
    %v105 = vrot.slane %v59, %v104
    %v106 = vmul.f32 %v100, %v105
    %v107 = vadd.f32 %v97, %v106
    %v108 = vmax.f32 %v107, 0.0
    %v109 = vpack.c.bf16 %v108, %v108
    %v110 = vld [vmem:[#allocation2] sm:$0xf]
    %v111 = vld [vmem:[#allocation2 + $0x4] sm:$0xf]
    %v112 = vld [vmem:[#allocation2 + $0x8] sm:$0xf]
    %v113 = vld [vmem:[#allocation2 + $0xc] sm:$0xf]
    %v114 = vld [vmem:[#allocation2 + $0x10] sm:$0xf]
    %v115 = vld [vmem:[#allocation2 + $0x14] sm:$0xf]
    %v116 = vld [vmem:[#allocation2 + $0x18] sm:$0xf]
    %v117 = vld [vmem:[#allocation2 + $0x1c] sm:$0xf]
    %v118 = vld [vmem:[#allocation2 + $0x20] sm:$0xf]
    %v119 = vld [vmem:[#allocation2 + $0x24] sm:$0xf]
    %v120 = vld [vmem:[#allocation2 + $0x28] sm:$0xf]
    %v121 = vld [vmem:[#allocation2 + $0x2c] sm:$0xf]
    %v122 = vld [vmem:[#allocation2 + $0x30] sm:$0xf]
    %v123 = vld [vmem:[#allocation2 + $0x34] sm:$0xf]
    %v124 = vld [vmem:[#allocation2 + $0x38] sm:$0xf]
    %v125 = vld [vmem:[#allocation2 + $0x3c] sm:$0xf]
    %v126 = vld [vmem:[%s4] sm:$0x1]
    %v128 = vlaneseq
    %v129 = vshrl.u32 %v128, 7
    %v130 = vsub.s32 0, %v129
    %v131 = vrot.slane %v126, %v130
    %v149 = vunpack.c.l.b16 %v110
    %v150 = vunpack.c.l.b16 %v111
    %v151 = vunpack.c.l.b16 %v112
    %v152 = vunpack.c.l.b16 %v113
    %v153 = vunpack.c.l.b16 %v114
    %v154 = vunpack.c.l.b16 %v115
    %v155 = vunpack.c.l.b16 %v116
    %v156 = vunpack.c.l.b16 %v117
    %v157 = vunpack.c.l.b16 %v118
    %v158 = vunpack.c.l.b16 %v119
    %v159 = vunpack.c.l.b16 %v120
    %v160 = vunpack.c.l.b16 %v121
    %v161 = vunpack.c.l.b16 %v122
    %v162 = vunpack.c.l.b16 %v123
    %v163 = vunpack.c.l.b16 %v124
    %v164 = vunpack.c.l.b16 %v125
    %v165 = vpack.c.b16 %v150, %v149
    %v166 = vpack.c.b16 %v152, %v151
    %v167 = vpack.c.b16 %v154, %v153
    %v168 = vpack.c.b16 %v156, %v155
    %v169 = vpack.c.b16 %v158, %v157
    %v170 = vpack.c.b16 %v160, %v159
    %v171 = vpack.c.b16 %v162, %v161
    %v172 = vpack.c.b16 %v164, %v163
    %181 = vmatprep.subr.bf16.mxu0 0
    %182 = vmatpush1.bf16.msra.mxu0 %v165
    %183 = vmatprep.subr.bf16.mxu0 0
    %184 = vmatpush1.bf16.msra.mxu0 %v166
    %185 = vmatprep.subr.bf16.mxu0 0
    %186 = vmatpush1.bf16.msra.mxu0 %v167
    %187 = vmatprep.subr.bf16.mxu0 0
    %188 = vmatpush1.bf16.msra.mxu0 %v168
    %189 = vmatprep.subr.bf16.mxu0 0
    %190 = vmatpush1.bf16.msra.mxu0 %v169
    %191 = vmatprep.subr.bf16.mxu0 0
    %192 = vmatpush1.bf16.msra.mxu0 %v170
    %193 = vmatprep.subr.bf16.mxu0 0
    %194 = vmatpush1.bf16.msra.mxu0 %v171
    %195 = vmatprep.subr.bf16.mxu0 0
    %196 = vmatpush1.bf16.msra.mxu0 %v172
    %197 = vmatprep.subr.bf16.mxu0 0
    %198 = vmatpush1.bf16.msra.mxu0 0
    %199 = vmatprep.subr.bf16.mxu0 0
    %200 = vmatpush1.bf16.msra.mxu0 0
    %201 = vmatprep.subr.bf16.mxu0 0
    %202 = vmatpush1.bf16.msra.mxu0 0
    %203 = vmatprep.subr.bf16.mxu0 0
    %204 = vmatpush1.bf16.msra.mxu0 0
    %205 = vmatprep.subr.bf16.mxu0 0
    %206 = vmatpush1.bf16.msra.mxu0 0
    %207 = vmatprep.subr.bf16.mxu0 0
    %208 = vmatpush1.bf16.msra.mxu0 0
    %209 = vmatprep.subr.bf16.mxu0 0
    %210 = vmatpush1.bf16.msra.mxu0 0
    %211 = vmatprep.subr.bf16.mxu0 0
    %212 = vmatpush1.bf16.msra.mxu0 0
    %213 = vmatprep.mubr.bf16.mxu0 0
    %214 = vmatmul.mubr.bf16.gmra.mrb[0].mxu0 %v109
    %v215 = vpop.f32.mrb[0].mxu0
    %v216 = vadd.f32 %v131, %v215
    %v217 = vpop.f32.mrb[0].mxu0
    %v218 = vpop.f32.mrb[0].mxu0
    %v219 = vpop.f32.mrb[0].mxu0
    %220 = vdwg.mxu0
    %v221 = vmax.f32 %v216, 0.0
    %v222 = vpack.c.bf16 %v221, %v221
    %v223 = vld [vmem:[#allocation5] sm:$0xf]
    %v224 = vld [vmem:[#allocation5 + $0x4] sm:$0xf]
    %v225 = vld [vmem:[#allocation5 + $0x8] sm:$0xf]
    %v226 = vld [vmem:[#allocation5 + $0xc] sm:$0xf]
    %v227 = vld [vmem:[#allocation5 + $0x10] sm:$0xf]
    %v228 = vld [vmem:[#allocation5 + $0x14] sm:$0xf]
    %v229 = vld [vmem:[#allocation5 + $0x18] sm:$0xf]
    %v230 = vld [vmem:[#allocation5 + $0x1c] sm:$0xf]
    %v231 = vld [vmem:[#allocation5 + $0x20] sm:$0xf]
    %v232 = vld [vmem:[#allocation5 + $0x24] sm:$0xf]
    %v233 = vld [vmem:[#allocation5 + $0x28] sm:$0xf]
    %v234 = vld [vmem:[#allocation5 + $0x2c] sm:$0xf]
    %v235 = vld [vmem:[#allocation5 + $0x30] sm:$0xf]
    %v236 = vld [vmem:[#allocation5 + $0x34] sm:$0xf]
    %v237 = vld [vmem:[#allocation5 + $0x38] sm:$0xf]
    %v238 = vld [vmem:[#allocation5 + $0x3c] sm:$0xf]
    %v239 = vld [vmem:[%s6] sm:$0x1]
    %v241 = vlaneseq
    %v242 = vshrl.u32 %v241, 7
    %v243 = vsub.s32 0, %v242
    %v244 = vrot.slane %v239, %v243
    %v262 = vunpack.c.l.b16 %v223
    %v263 = vunpack.c.l.b16 %v224
    %v264 = vunpack.c.l.b16 %v225
    %v265 = vunpack.c.l.b16 %v226
    %v266 = vunpack.c.l.b16 %v227
    %v267 = vunpack.c.l.b16 %v228
    %v268 = vunpack.c.l.b16 %v229
    %v269 = vunpack.c.l.b16 %v230
    %v270 = vunpack.c.l.b16 %v231
    %v271 = vunpack.c.l.b16 %v232
    %v272 = vunpack.c.l.b16 %v233
    %v273 = vunpack.c.l.b16 %v234
    %v274 = vunpack.c.l.b16 %v235
    %v275 = vunpack.c.l.b16 %v236
    %v276 = vunpack.c.l.b16 %v237
    %v277 = vunpack.c.l.b16 %v238
    %v278 = vpack.c.b16 %v263, %v262
    %v279 = vpack.c.b16 %v265, %v264
    %v280 = vpack.c.b16 %v267, %v266
    %v281 = vpack.c.b16 %v269, %v268
    %v282 = vpack.c.b16 %v271, %v270
    %v283 = vpack.c.b16 %v273, %v272
    %v284 = vpack.c.b16 %v275, %v274
    %v285 = vpack.c.b16 %v277, %v276
    %294 = vmatprep.subr.bf16.mxu0 0
    %295 = vmatpush1.bf16.msra.mxu0 %v278
    %296 = vmatprep.subr.bf16.mxu0 0
    %297 = vmatpush1.bf16.msra.mxu0 %v279
    %298 = vmatprep.subr.bf16.mxu0 0
    %299 = vmatpush1.bf16.msra.mxu0 %v280
    %300 = vmatprep.subr.bf16.mxu0 0
    %301 = vmatpush1.bf16.msra.mxu0 %v281
    %302 = vmatprep.subr.bf16.mxu0 0
    %303 = vmatpush1.bf16.msra.mxu0 %v282
    %304 = vmatprep.subr.bf16.mxu0 0
    %305 = vmatpush1.bf16.msra.mxu0 %v283
    %306 = vmatprep.subr.bf16.mxu0 0
    %307 = vmatpush1.bf16.msra.mxu0 %v284
    %308 = vmatprep.subr.bf16.mxu0 0
    %309 = vmatpush1.bf16.msra.mxu0 %v285
    %310 = vmatprep.subr.bf16.mxu0 0
    %311 = vmatpush1.bf16.msra.mxu0 0
    %312 = vmatprep.subr.bf16.mxu0 0
    %313 = vmatpush1.bf16.msra.mxu0 0
    %314 = vmatprep.subr.bf16.mxu0 0
    %315 = vmatpush1.bf16.msra.mxu0 0
    %316 = vmatprep.subr.bf16.mxu0 0
    %317 = vmatpush1.bf16.msra.mxu0 0
    %318 = vmatprep.subr.bf16.mxu0 0
    %319 = vmatpush1.bf16.msra.mxu0 0
    %320 = vmatprep.subr.bf16.mxu0 0
    %321 = vmatpush1.bf16.msra.mxu0 0
    %322 = vmatprep.subr.bf16.mxu0 0
    %323 = vmatpush1.bf16.msra.mxu0 0
    %324 = vmatprep.subr.bf16.mxu0 0
    %325 = vmatpush1.bf16.msra.mxu0 0
    %326 = vmatprep.mubr.bf16.mxu0 0
    %327 = vmatmul.mubr.bf16.gmra.mrb[0].mxu0 %v222
    %v328 = vpop.f32.mrb[0].mxu0
    %v329 = vadd.f32 %v244, %v328
    %v330 = vpop.f32.mrb[0].mxu0
    %v331 = vpop.f32.mrb[0].mxu0
    %v332 = vpop.f32.mrb[0].mxu0
    %333 = vdwg.mxu0
    %334 = vst [vmem:[#allocation7] sm:$0xff] %v329
    %v335 = vlaneseq
    %v336 = vand.u32 %v335, 127
    %vm337 = vcmp.lt.s32.totalorder %v336, 2
    %v338 = vsel %vm337, %v329, -inf
    %339 = vmax.xlane.f32.xlu0 %v338
    %v340 = vpop.xlane.xlu0 %339
    %vm341 = vcmp.eq.f32.partialorder %v338, %v340
    %v342 = vsel %vm341, %v336, 2
    %v343 = vand.u32 %v342, 65535
    %v344 = vshra.s32 %v342, 16
    %v345 = vcvt.s32.f32 %v343
    %v346 = vcvt.s32.f32 %v344
    %347 = vmin.xlane.f32.xlu0 %v346
    %v348 = vpop.xlane.xlu0 %347
    %vm349 = vcmp.eq.f32.partialorder %v346, %v348
    %v350 = vsel %vm349, %v345, inf
    %351 = vmin.xlane.f32.xlu0 %v350
    %v352 = vpop.xlane.xlu0 %351
    %v353 = vcvt.f32.s32 %v352
    %v354 = vcvt.f32.s32 %v348
    %v355 = vshll.u32 %v354, 16
    %v356 = vadd.s32 %v355, %v353
    %vm357 = vcmp.lt.s32.totalorder %v356, 1
    %v358 = vsel %vm357, %v356, 1
    %vm359 = vcmask 7168
    %360 = vst.msk [vmem:[%s8] sm:$0xff] %vm359, %v358
    // Predicated region
    $region38: #{tpu_custom_call.1} parent=1 // pred_check
      _
    $region39: #{tpu_custom_call.1} parent=1 // pred_check_branch
      %362 = sbr.rel (0) target = $region41
    $region40: #{tpu_custom_call.1} parent=1 // pred_region
      %s364 = ssub.s32 128, 128
      %365 = vsyncadd [#allocation4], %s364
      %s367 = sshll.u32 [#allocation7], 4
      %s368 = int_to_ptr.vmem [resolvable:$true] %s367
      %370 = dma.vmem_to_hbm [thread:$0]  %s368, 128, %s7, [#allocation4]
    $region41: #{tpu_custom_call.1} parent=1 // pred_fallthru
      _
    // Predicated region
    $region42: #{tpu_custom_call.1} parent=1 // pred_check
      _
    $region43: #{tpu_custom_call.1} parent=1 // pred_check_branch
      %372 = sbr.rel (0) target = $region45
    $region44: #{tpu_custom_call.1} parent=1 // pred_region
      _
    $region45: #{tpu_custom_call.1} parent=1 // pred_fallthru
      _
    // Predicated region
    $region46: #{tpu_custom_call.1} parent=1 // pred_check
      _
    $region47: #{tpu_custom_call.1} parent=1 // pred_check_branch
      %374 = sbr.rel (0) target = $region49
    $region48: #{tpu_custom_call.1} parent=1 // pred_region
      %375 = dma.done [#allocation4], 128
    $region49: #{tpu_custom_call.1} parent=1 // pred_fallthru
      _
    // Predicated region
    $region50: #{tpu_custom_call.1} parent=1 // pred_check
      _
    $region51: #{tpu_custom_call.1} parent=1 // pred_check_branch
      %377 = sbr.rel (0) target = $region53
    $region52: #{tpu_custom_call.1} parent=1 // pred_region
      _
    $region53: #{tpu_custom_call.1} parent=1 // pred_fallthru
      _
    %378 = vsyncpa [#allocation3], 1
    %379 = vsyncpa [#allocation6], 1
    %380 = vsyncpa [#allocation4], 1

</llo_original>
